<compile_context>
chip_gen: v7x
topology: tpu7x:2x2x1
jax: 0.10.0
libtpu: 0.0.40
codegen_flags: <defaults>
</compile_context>

<pallas_src>
import functools

import jax
import jax.numpy as jnp
from jax.experimental import pallas as pl
from jax.experimental.pallas import tpu as pltpu

EPS = 1e-6
LANES = 128
TILE_ROWS = 4096        # (4096, 128) f32 tile = 2 MiB per input per buffer
NUM_SPLITS = 2          # leading "parallel" grid axis (2 TensorCores on v7x)


def _charbonnier_kernel(x_ref, y_ref, out_ref, acc_ref, *,
                        n_valid, tile_rows, blocks_per_split):
    c = pl.program_id(0)          # split ("core") index
    j = pl.program_id(1)          # block index within the split

    @pl.when(j == 0)
    def _():
        acc_ref[...] = jnp.zeros_like(acc_ref)

    tile_elems = tile_rows * LANES
    logical_block = c * blocks_per_split + j
    start = logical_block * tile_elems       # first flat element of this tile

    d = x_ref[...].astype(jnp.float32) - y_ref[...].astype(jnp.float32)
    err = jnp.sqrt(d * d + EPS)              # (tile_rows, LANES)

    # Fast path: tile entirely in range -> plain VPU accumulation (no XLU).
    @pl.when(start + tile_elems <= n_valid)
    def _():
        acc_ref[...] += err.reshape(-1, 8, LANES).sum(axis=0)

    # Slow path (at most one tile per split): mask out-of-range elements.
    @pl.when(start + tile_elems > n_valid)
    def _():
        row = jax.lax.broadcasted_iota(jnp.int32, (tile_rows, LANES), 0)
        lane = jax.lax.broadcasted_iota(jnp.int32, (tile_rows, LANES), 1)
        gidx = start + row * LANES + lane
        masked = jnp.where(gidx < n_valid, err, jnp.float32(0.0))
        acc_ref[...] += masked.reshape(-1, 8, LANES).sum(axis=0)

    @pl.when(j == pl.num_programs(1) - 1)
    def _():
        out_ref[0] = acc_ref[...]


@jax.jit
def l1_charbonnier_loss(x, y):
    assert x.shape == y.shape, "X and Y must have the same shape"
    n = x.size

    xf = jnp.ravel(x)     # free (metadata only) for contiguous inputs
    yf = jnp.ravel(y)

    # Only the ragged lane tail (< 128 elements) ever needs padding; pad
    # values are masked inside the kernel so their contents are irrelevant.
    rem = n % LANES
    if rem:
        xf = jnp.pad(xf, (0, LANES - rem))
        yf = jnp.pad(yf, (0, LANES - rem))

    rows = xf.size // LANES
    x2 = xf.reshape(rows, LANES)
    y2 = yf.reshape(rows, LANES)

    # Tile rows: as large as TILE_ROWS, always a multiple of 8 (sublane tile).
    tile_rows = min(TILE_ROWS, ((rows + 7) // 8) * 8)
    num_blocks = -(-rows // tile_rows)
    blocks_per_split = -(-num_blocks // NUM_SPLITS)

    def in_map(c, j):
        # Clamp so a DMA never starts fully out of bounds; the in-kernel mask
        # (computed from the *logical* block id) zeroes any duplicate work.
        return (jnp.minimum(c * blocks_per_split + j, num_blocks - 1), 0)

    kernel = functools.partial(
        _charbonnier_kernel,
        n_valid=n,
        tile_rows=tile_rows,
        blocks_per_split=blocks_per_split,
    )

    bytes_accessed = (x.size * x.dtype.itemsize
                      + y.size * y.dtype.itemsize
                      + NUM_SPLITS * 8 * LANES * 4)
    cost = pl.CostEstimate(flops=4 * n, transcendentals=n,
                           bytes_accessed=int(bytes_accessed))

    partials = pl.pallas_call(
        kernel,
        out_shape=jax.ShapeDtypeStruct((NUM_SPLITS, 8, LANES), jnp.float32),
        grid_spec=pltpu.PrefetchScalarGridSpec(
            num_scalar_prefetch=0,
            grid=(NUM_SPLITS, blocks_per_split),
            in_specs=[
                pl.BlockSpec((tile_rows, LANES), in_map),
                pl.BlockSpec((tile_rows, LANES), in_map),
            ],
            out_specs=pl.BlockSpec((1, 8, LANES), lambda c, j: (c, 0, 0)),
            scratch_shapes=[pltpu.VMEM((8, LANES), jnp.float32)],
        ),
        compiler_params=pltpu.CompilerParams(
            dimension_semantics=("parallel", "arbitrary"),
        ),
        cost_estimate=cost,
    )(x2, y2)

    # Tiny (2, 8, 128) cross-lane reduce done once, outside the hot loop.
    total = jnp.sum(partials)
    return total / jnp.float32(n)


if __name__ == "__main__":
    key = jax.random.PRNGKey(0)
    kx, ky = jax.random.split(key)
    # Small NCHW-like shapes consistent with an image loss.
    x = jax.random.normal(kx, (2, 4, 16, 16), dtype=jnp.float32)
    y = jax.random.normal(ky, (2, 4, 16, 16), dtype=jnp.float32)

    loss = l1_charbonnier_loss(x, y)
    jax.block_until_ready(loss)

    # Reference check (plain JAX, same math as the PyTorch module).
    ref = jnp.mean(jnp.sqrt((x - y) * (x - y) + EPS))
    assert jnp.allclose(loss, ref, rtol=1e-5, atol=1e-6), (loss, ref)

    print("KERNEL_OK")
</pallas_src>

<mosaic_0001>
module attributes {stable_mosaic.version = 11 : i64} {
  func.func @_charbonnier_kernel(%arg0: i32, %arg1: i32, %arg2: memref<16x128xf32, #tpu.memory_space<vmem>>, %arg3: memref<16x128xf32, #tpu.memory_space<vmem>>, %arg4: memref<1x8x128xf32, #tpu.memory_space<vmem>>, %arg5: memref<8x128xf32, #tpu.memory_space<vmem>>) attributes {dimension_semantics = [#tpu.dimension_semantics<parallel>, #tpu.dimension_semantics<arbitrary>], iteration_bounds = array<i64: 2, 1>, scalar_prefetch = 0 : i64, scratch_operands = 1 : i64, tpu.core_type = #tpu.core_type<tc>, window_params = [{transform_indices = @transform_0, window_bounds = array<i64: 16, 128>}, {transform_indices = @transform_1, window_bounds = array<i64: 16, 128>}, {transform_indices = @transform_2, window_bounds = array<i64: 1, 8, 128>}]} {
    %c0_i32 = arith.constant 0 : i32
    %0 = arith.cmpi eq, %arg1, %c0_i32 : i32
    %1 = arith.extui %0 : i1 to i32
    %c0_i32_0 = arith.constant 0 : i32
    %2 = arith.cmpi ne, %1, %c0_i32_0 : i32
    scf.if %2 {
      %cst_12 = arith.constant 0.000000e+00 : f32
      %24 = vector.broadcast %cst_12 : f32 to vector<8x128xf32>
      %c0_13 = arith.constant 0 : index
      %c0_14 = arith.constant 0 : index
      %25 = vector.load %arg5[%c0_13, %c0_14] : memref<8x128xf32, #tpu.memory_space<vmem>>, vector<8x128xf32>
      tpu.vector_store %arg5[%c0_13, %c0_14], %24 {strides = array<i32>} : memref<8x128xf32, #tpu.memory_space<vmem>>, vector<8x128xf32>,
    } else {
    }
    %c1_i32 = arith.constant 1 : i32
    %3 = arith.muli %arg0, %c1_i32 : i32
    %4 = arith.addi %3, %arg1 : i32
    %c2048_i32 = arith.constant 2048 : i32
    %5 = arith.muli %4, %c2048_i32 : i32
    %c0 = arith.constant 0 : index
    %c0_1 = arith.constant 0 : index
    %6 = vector.load %arg2[%c0, %c0_1] : memref<16x128xf32, #tpu.memory_space<vmem>>, vector<16x128xf32>
    %c0_2 = arith.constant 0 : index
    %c0_3 = arith.constant 0 : index
    %7 = vector.load %arg3[%c0_2, %c0_3] : memref<16x128xf32, #tpu.memory_space<vmem>>, vector<16x128xf32>
    %8 = arith.subf %6, %7 : vector<16x128xf32>
    %9 = arith.mulf %8, %8 : vector<16x128xf32>
    %cst = arith.constant 9.99999997E-7 : f32
    %10 = vector.broadcast %cst : f32 to vector<16x128xf32>
    %11 = arith.addf %9, %10 : vector<16x128xf32>
    %12 = math.sqrt %11 : vector<16x128xf32>
    %c2048_i32_4 = arith.constant 2048 : i32
    %13 = arith.addi %5, %c2048_i32_4 : i32
    %c2048_i32_5 = arith.constant 2048 : i32
    %14 = arith.cmpi sle, %13, %c2048_i32_5 : i32
    %15 = arith.extui %14 : i1 to i32
    %c0_i32_6 = arith.constant 0 : i32
    %16 = arith.cmpi ne, %15, %c0_i32_6 : i32
    scf.if %16 {
      %c0_12 = arith.constant 0 : index
      %c0_13 = arith.constant 0 : index
      %24 = vector.load %arg5[%c0_12, %c0_13] : memref<8x128xf32, #tpu.memory_space<vmem>>, vector<8x128xf32>
      %25 = vector.shape_cast %12 : vector<16x128xf32> to vector<2x8x128xf32>
      %cst_14 = arith.constant dense<0.000000e+00> : vector<8x128xf32>
      %26 = vector.multi_reduction <add>, %25, %cst_14 [0] : vector<2x8x128xf32> to vector<8x128xf32>
      %27 = arith.addf %24, %26 : vector<8x128xf32>
      %c0_15 = arith.constant 0 : index
      %c0_16 = arith.constant 0 : index
      %28 = vector.load %arg5[%c0_15, %c0_16] : memref<8x128xf32, #tpu.memory_space<vmem>>, vector<8x128xf32>
      tpu.vector_store %arg5[%c0_15, %c0_16], %27 {strides = array<i32>} : memref<8x128xf32, #tpu.memory_space<vmem>>, vector<8x128xf32>,
    } else {
    }
    %c2048_i32_7 = arith.constant 2048 : i32
    %17 = arith.addi %5, %c2048_i32_7 : i32
    %c2048_i32_8 = arith.constant 2048 : i32
    %18 = arith.cmpi sgt, %17, %c2048_i32_8 : i32
    %19 = arith.extui %18 : i1 to i32
    %c0_i32_9 = arith.constant 0 : i32
    %20 = arith.cmpi ne, %19, %c0_i32_9 : i32
    scf.if %20 {
      %24 = tpu.iota {dimensions = array<i32: 0>} : vector<16x128xi32>
      %25 = tpu.iota {dimensions = array<i32: 1>} : vector<16x128xi32>
      %c128_i32 = arith.constant 128 : i32
      %26 = vector.broadcast %c128_i32 : i32 to vector<16x128xi32>
      %27 = arith.muli %24, %26 : vector<16x128xi32>
      %28 = vector.broadcast %5 : i32 to vector<16x128xi32>
      %29 = arith.addi %28, %27 : vector<16x128xi32>
      %30 = arith.addi %29, %25 : vector<16x128xi32>
      %c2048_i32_12 = arith.constant 2048 : i32
      %31 = vector.broadcast %c2048_i32_12 : i32 to vector<16x128xi32>
      %32 = arith.cmpi slt, %30, %31 : vector<16x128xi32>
      %cst_13 = arith.constant 0.000000e+00 : f32
      %33 = vector.broadcast %cst_13 : f32 to vector<16x128xf32>
      %34 = arith.select %32, %12, %33 : vector<16x128xi1>, vector<16x128xf32>
      %c0_14 = arith.constant 0 : index
      %c0_15 = arith.constant 0 : index
      %35 = vector.load %arg5[%c0_14, %c0_15] : memref<8x128xf32, #tpu.memory_space<vmem>>, vector<8x128xf32>
      %36 = vector.shape_cast %34 : vector<16x128xf32> to vector<2x8x128xf32>
      %cst_16 = arith.constant dense<0.000000e+00> : vector<8x128xf32>
      %37 = vector.multi_reduction <add>, %36, %cst_16 [0] : vector<2x8x128xf32> to vector<8x128xf32>
      %38 = arith.addf %35, %37 : vector<8x128xf32>
      %c0_17 = arith.constant 0 : index
      %c0_18 = arith.constant 0 : index
      %39 = vector.load %arg5[%c0_17, %c0_18] : memref<8x128xf32, #tpu.memory_space<vmem>>, vector<8x128xf32>
      tpu.vector_store %arg5[%c0_17, %c0_18], %38 {strides = array<i32>} : memref<8x128xf32, #tpu.memory_space<vmem>>, vector<8x128xf32>,
    } else {
    }
    %c0_i32_10 = arith.constant 0 : i32
    %21 = arith.cmpi eq, %arg1, %c0_i32_10 : i32
    %22 = arith.extui %21 : i1 to i32
    %c0_i32_11 = arith.constant 0 : i32
    %23 = arith.cmpi ne, %22, %c0_i32_11 : i32
    scf.if %23 {
      %c0_12 = arith.constant 0 : index
      %c0_13 = arith.constant 0 : index
      %24 = vector.load %arg5[%c0_12, %c0_13] : memref<8x128xf32, #tpu.memory_space<vmem>>, vector<8x128xf32>
      %c0_14 = arith.constant 0 : index
      %c0_15 = arith.constant 0 : index
      %c0_16 = arith.constant 0 : index
      %25 = vector.load %arg4[%c0_14, %c0_15, %c0_16] : memref<1x8x128xf32, #tpu.memory_space<vmem>>, vector<1x8x128xf32>
      %26 = vector.shape_cast %25 : vector<1x8x128xf32> to vector<8x128xf32>
      %27 = vector.shape_cast %24 : vector<8x128xf32> to vector<1x8x128xf32>
      tpu.vector_store %arg4[%c0_14, %c0_15, %c0_16], %27 {strides = array<i32>} : memref<1x8x128xf32, #tpu.memory_space<vmem>>, vector<1x8x128xf32>,
    } else {
    }
    return
  }
  func.func @transform_0(%arg0: i32, %arg1: i32) -> (i32, i32) {
    %c1_i32 = arith.constant 1 : i32
    %0 = arith.muli %arg0, %c1_i32 : i32
    %1 = arith.addi %0, %arg1 : i32
    %c0_i32 = arith.constant 0 : i32
    %2 = arith.minsi %1, %c0_i32 : i32
    %c0_i32_0 = arith.constant 0 : i32
    %c0_i32_1 = arith.constant 0 : i32
    return %2, %c0_i32_0 : i32, i32
  }
  func.func @transform_1(%arg0: i32, %arg1: i32) -> (i32, i32) {
    %c1_i32 = arith.constant 1 : i32
    %0 = arith.muli %arg0, %c1_i32 : i32
    %1 = arith.addi %0, %arg1 : i32
    %c0_i32 = arith.constant 0 : i32
    %2 = arith.minsi %1, %c0_i32 : i32
    %c0_i32_0 = arith.constant 0 : i32
    %c0_i32_1 = arith.constant 0 : i32
    return %2, %c0_i32_0 : i32, i32
  }
  func.func @transform_2(%arg0: i32, %arg1: i32) -> (i32, i32, i32) {
    %c0_i32 = arith.constant 0 : i32
    %c0_i32_0 = arith.constant 0 : i32
    %c0_i32_1 = arith.constant 0 : i32
    return %arg0, %c0_i32, %c0_i32_0 : i32, i32, i32
  }
}

</mosaic_0001>

<llo_original>
// kernel: l1_charbonnier_loss.1
$region0: #{l1_charbonnier_loss.1}
  #allocation0 [shape = 'u32[]', space=smem, size = 0x4, offset = 0x4, fixed_abs, tag = 'smem constant byte address 0x4 - core index']
  #allocation1 [shape = 'u32[144,128]{1,0:T(1,128)}', space=vmem, size = 0x12000, scoped, tag = 'internal scratch']
  #allocation2 [shape = 'f32[8,128]{1,0:T(8,128)}', space=vmem, size = 0x1000, scoped, tag = 'scratch operand']
  %s0 = inlined_call_operand.vmem [shape: f32[16,128], index: 0, kind: input, shape index: {}]
  %s1 = inlined_call_operand.vmem [shape: f32[16,128], index: 1, kind: input, shape index: {}]
  %s2 = inlined_call_operand.vmem [shape: f32[2,8,128], index: 2, kind: output, shape index: {}]
  %s3 = sld [smem:[#allocation0]]
  $region57: #{l1_charbonnier_loss.1} parent=0
    _
  %s5 = ssub.s32 1, %s3
  %s6 = scalar_select 0, %s5, %s3
  loop: start=0, step=1, limit=4
  $region2: #{l1_charbonnier_loss.1} parent=0 // loop_pre_header
    _
  $region3: #{l1_charbonnier_loss.1} parent=0 // loop_header
    %s8 = sphi 0, %s12
    %p9 = scmp.ge.s32.totalorder %s8, 4
    %s15 = sphi 0, %s27
    %s16 = sphi 0, %s23
    %s17 = sphi 0, %s15
    %s18 = sphi 0, %s16
    %s19 = sphi 0, %s17
    %s20 = sphi 0, %s18
    %s36 = sphi 0, %s38
    %s39 = sphi 0, %s36
    %s40 = sphi 0, %s39
    %s56 = sphi 0, %s40
    %s68 = sphi 0, %s70
    %s71 = sphi 0, %s68
    %s72 = sphi 0, %s71
    %s88 = sphi 0, %s72
    %s94 = sphi 0, %s96
    %s97 = sphi 0, %s94
    %s98 = sphi 0, %s97
    %s114 = sphi 0, %s98
  $region4: #{l1_charbonnier_loss.1} parent=0 // loop_header_branch
    %11 = sbr.rel (%p9) target = $region8
  $region5: #{l1_charbonnier_loss.1} parent=0 // loop_body
    %s13 = ssub.s32 %s8, 1
    %s14 = ssub.s32 %s8, 2
    %s21 = sadd.s32 1, %s16
    %p22 = scmp.ge.s32.totalorder %s21, 1
    %s23 = scalar_select %p22, 0, %s21
    %s24 = sadd.s32 1, %s15
    %s25 = scalar_select %p22, %s24, %s15
    %p26 = scmp.ge.s32.totalorder %s25, 2
    %s27 = scalar_select %p26, 0, %s25
    %s28 = sadd.s32 %s15, %s16
    %p29 = scmp.lt.s32.totalorder %s28, 0
    %s30 = scalar_select %p29, %s28, 0
    %s31 = sadd.s32 %s27, %s23
    %p32 = scmp.lt.s32.totalorder %s31, 0
    %s33 = scalar_select %p32, %s31, 0
    %s34 = ssub.s32 %s30, %s33
    %p35 = scmp.eq.s32.totalorder %s34, 0
    %s37 = sadd.s32 %s36, 1
    %s38 = scalar_select %p35, %s36, %s37
    %p41 = pneg %p35
    %p42 = scmp.eq.s32.totalorder %s8, 1
    %p43 = por %p41, %p42
    %p44 = scmp.ne.s32.totalorder %s36, %s39
    %p45 = scmp.eq.s32.totalorder %s8, 0
    %p46 = por %p44, %p45
    %p47 = scmp.ne.s32.totalorder %s36, %s39
    %p48 = scmp.eq.s32.totalorder %s13, 1
    %p49 = por %p47, %p48
    %p50 = scmp.ne.s32.totalorder %s39, %s40
    %p51 = scmp.eq.s32.totalorder %s13, 0
    %p52 = por %p50, %p51
    %p53 = scmp.ne.s32.totalorder %s39, %s40
    %p54 = scmp.eq.s32.totalorder %s14, 1
    %p55 = por %p53, %p54
    %p57 = scmp.ne.s32.totalorder %s40, %s56
    %p58 = scmp.eq.s32.totalorder %s14, 0
    %p59 = por %p57, %p58
    %s60 = sadd.s32 %s15, %s16
    %p61 = scmp.lt.s32.totalorder %s60, 0
    %s62 = scalar_select %p61, %s60, 0
    %s63 = sadd.s32 %s27, %s23
    %p64 = scmp.lt.s32.totalorder %s63, 0
    %s65 = scalar_select %p64, %s63, 0
    %s66 = ssub.s32 %s62, %s65
    %p67 = scmp.eq.s32.totalorder %s66, 0
    %s69 = sadd.s32 %s68, 1
    %s70 = scalar_select %p67, %s68, %s69
    %p73 = pneg %p67
    %p74 = scmp.eq.s32.totalorder %s8, 1
    %p75 = por %p73, %p74
    %p76 = scmp.ne.s32.totalorder %s68, %s71
    %p77 = scmp.eq.s32.totalorder %s8, 0
    %p78 = por %p76, %p77
    %p79 = scmp.ne.s32.totalorder %s68, %s71
    %p80 = scmp.eq.s32.totalorder %s13, 1
    %p81 = por %p79, %p80
    %p82 = scmp.ne.s32.totalorder %s71, %s72
    %p83 = scmp.eq.s32.totalorder %s13, 0
    %p84 = por %p82, %p83
    %p85 = scmp.ne.s32.totalorder %s71, %s72
    %p86 = scmp.eq.s32.totalorder %s14, 1
    %p87 = por %p85, %p86
    %p89 = scmp.ne.s32.totalorder %s72, %s88
    %p90 = scmp.eq.s32.totalorder %s14, 0
    %p91 = por %p89, %p90
    %s92 = ssub.s32 %s15, %s27
    %p93 = scmp.eq.s32.totalorder %s92, 0
    %s95 = sadd.s32 %s94, 1
    %s96 = scalar_select %p93, %s94, %s95
    %p99 = pneg %p93
    %p100 = scmp.eq.s32.totalorder %s8, 1
    %p101 = por %p99, %p100
    %p102 = scmp.ne.s32.totalorder %s94, %s97
    %p103 = scmp.eq.s32.totalorder %s8, 0
    %p104 = por %p102, %p103
    %p105 = scmp.ne.s32.totalorder %s94, %s97
    %p106 = scmp.eq.s32.totalorder %s13, 1
    %p107 = por %p105, %p106
    %p108 = scmp.ne.s32.totalorder %s97, %s98
    %p109 = scmp.eq.s32.totalorder %s13, 0
    %p110 = por %p108, %p109
    %p111 = scmp.ne.s32.totalorder %s97, %s98
    %p112 = scmp.eq.s32.totalorder %s14, 1
    %p113 = por %p111, %p112
    %p115 = scmp.ne.s32.totalorder %s98, %s114
    %p116 = scmp.eq.s32.totalorder %s14, 0
    %p117 = por %p115, %p116
    %p118 = scmp.le.s32.totalorder 1, %s8
    %p119 = scmp.lt.s32.totalorder %s8, 3
    %p120 = pnand %p118, %p119
    %p121 = pneg %p120
    // Predicated region
    $region9: #{l1_charbonnier_loss.1} parent=5 // pred_check
      _
    $region10: #{l1_charbonnier_loss.1} parent=5 // pred_check_branch
      %123 = sbr.rel (%p120) target = $region12
    $region11: #{l1_charbonnier_loss.1} parent=5 // pred_region
      %s124 = ssub.s32 %s8, 1
    $region12: #{l1_charbonnier_loss.1} parent=5 // pred_fallthru
      _
    %p125 = scmp.lt.s32.totalorder %s8, 2
    // Predicated region
    $region13: #{l1_charbonnier_loss.1} parent=5 // pred_check
      %p126 = pneg %p125
    $region14: #{l1_charbonnier_loss.1} parent=5 // pred_check_branch
      %128 = sbr.rel (%p126) target = $region16
    $region15: #{l1_charbonnier_loss.1} parent=5 // pred_region
      // Predicated region
      $region17: #{l1_charbonnier_loss.1} parent=15 // pred_check
        %p129 = pneg %p46
      $region18: #{l1_charbonnier_loss.1} parent=15 // pred_check_branch
        %131 = sbr.rel (%p129) target = $region20
      $region19: #{l1_charbonnier_loss.1} parent=15 // pred_region
        %s132 = sadd.s32 %s15, %s16
        %p133 = scmp.lt.s32.totalorder %s132, 0
        %s134 = scalar_select %p133, %s132, 0
        %s135 = smul.u32 2, %s134
        %p136 = scmp.lt.s32.totalorder %s135, 1
        %s137 = scalar_select %p136, %s135, 1
        %s138 = smul.addr %s137, 8
        %s139 = scalar_lea.vmem %s0, %s138
        %s140 = sadd.s32 %s15, %s16
        %p141 = scmp.lt.s32.totalorder %s140, 0
        %s142 = scalar_select %p141, %s140, 0
        %s143 = smul.u32 2, %s142
      $region20: #{l1_charbonnier_loss.1} parent=15 // pred_fallthru
        _
      // Predicated region
      $region21: #{l1_charbonnier_loss.1} parent=15 // pred_check
        %p144 = pneg %p78
      $region22: #{l1_charbonnier_loss.1} parent=15 // pred_check_branch
        %146 = sbr.rel (%p144) target = $region24
      $region23: #{l1_charbonnier_loss.1} parent=15 // pred_region
        %s147 = sadd.s32 %s15, %s16
        %p148 = scmp.lt.s32.totalorder %s147, 0
        %s149 = scalar_select %p148, %s147, 0
        %s150 = smul.u32 2, %s149
        %p151 = scmp.lt.s32.totalorder %s150, 1
        %s152 = scalar_select %p151, %s150, 1
        %s153 = smul.addr %s152, 8
        %s154 = scalar_lea.vmem %s1, %s153
        %s155 = sadd.s32 %s15, %s16
        %p156 = scmp.lt.s32.totalorder %s155, 0
        %s157 = scalar_select %p156, %s155, 0
        %s158 = smul.u32 2, %s157
      $region24: #{l1_charbonnier_loss.1} parent=15 // pred_fallthru
        _
    $region16: #{l1_charbonnier_loss.1} parent=5 // pred_fallthru
      _
    %p159 = scmp.le.s32.totalorder 1, %s8
    %p160 = scmp.lt.s32.totalorder %s8, 3
    %p161 = pnand %p159, %p160
    %p162 = pneg %p161
    // Predicated region
    $region25: #{l1_charbonnier_loss.1} parent=5 // pred_check
      _
    $region26: #{l1_charbonnier_loss.1} parent=5 // pred_check_branch
      %164 = sbr.rel (%p161) target = $region28
    $region27: #{l1_charbonnier_loss.1} parent=5 // pred_region
      %s165 = ssub.s32 %s8, 1
      %s166 = sadd.s32 %s17, %s18
      %p167 = scmp.lt.s32.totalorder %s166, 0
      %s168 = scalar_select %p167, %s166, 0
      %s169 = smul.u32 2, %s168
      %p170 = scmp.lt.s32.totalorder %s169, 1
      %s171 = scalar_select %p170, %s169, 1
      %s172 = smul.addr %s171, 8
      %s173 = scalar_lea.vmem %s0, %s172
      %p174 = pneg %p52
      %p175 = pneg %p49
      %s176 = sadd.s32 %s17, %s18
      %p177 = scmp.lt.s32.totalorder %s176, 0
      %s178 = scalar_select %p177, %s176, 0
      %s179 = smul.u32 2, %s178
      %p180 = scmp.lt.s32.totalorder %s179, 1
      %s181 = scalar_select %p180, %s179, 1
      %s182 = smul.addr %s181, 8
      %s183 = scalar_lea.vmem %s1, %s182
      %p184 = pneg %p84
      %p185 = pneg %p81
      %p186 = pneg %p110
      %p187 = pneg %p107
      %p188 = scmp.lt.s32.totalorder %s17, 1
      %s189 = scalar_select %p188, %s17, 1
      %s190 = smul.addr %s189, 8
      %s191 = scalar_lea.vmem %s2, %s190
      %s192 = sadd.s32 %s17, %s18
      %p193 = scmp.lt.s32.totalorder %s192, 0
      %s194 = scalar_select %p193, %s192, 0
      %s195 = smul.u32 2, %s194
      %p196 = scmp.lt.s32.totalorder %s195, 1
      %s197 = scalar_select %p196, %s195, 1
      %s198 = smul.addr %s197, 8
      %s199 = scalar_lea.vmem %s0, %s198
      %s200 = sadd.s32 %s17, %s18
      %p201 = scmp.lt.s32.totalorder %s200, 0
      %s202 = scalar_select %p201, %s200, 0
      %s203 = smul.u32 2, %s202
      %s204 = sadd.s32 %s17, %s18
      %p205 = scmp.lt.s32.totalorder %s204, 0
      %s206 = scalar_select %p205, %s204, 0
      %s207 = smul.u32 2, %s206
      %p208 = scmp.lt.s32.totalorder %s207, 1
      %s209 = scalar_select %p208, %s207, 1
      %s210 = smul.addr %s209, 8
      %s211 = scalar_lea.vmem %s1, %s210
      %s212 = sadd.s32 %s17, %s18
      %p213 = scmp.lt.s32.totalorder %s212, 0
      %s214 = scalar_select %p213, %s212, 0
      %s215 = smul.u32 2, %s214
      %p216 = scmp.lt.s32.totalorder %s17, 1
      %s217 = scalar_select %p216, %s17, 1
      %s218 = smul.addr %s217, 8
      %s219 = scalar_lea.vmem %s2, %s218
      %p220 = scmp.eq.s32.totalorder %s18, 0
      // Predicated region
      $region29: #{l1_charbonnier_loss.1} parent=27 // pred_check
        %p221 = pneg %p220
      $region30: #{l1_charbonnier_loss.1} parent=27 // pred_check_branch
        %223 = sbr.rel (%p221) target = $region32
      $region31: #{l1_charbonnier_loss.1} parent=27 // pred_region
        %224 = vst [vmem:[#allocation2] sm:$0xff] 0.0
      $region32: #{l1_charbonnier_loss.1} parent=27 // pred_fallthru
        _
      %s225 = sadd.s32 %s17, %s18
      %s226 = smul.u32 %s225, 2048
      %v227 = vld [vmem:[%s199] sm:$0xff]
      %v228 = vld [vmem:[%s199 + $0x8] sm:$0xff]
      %v229 = vld [vmem:[%s211] sm:$0xff]
      %v230 = vld [vmem:[%s211 + $0x8] sm:$0xff]
      %v231 = vsub.f32 %v227, %v229
      %v232 = vsub.f32 %v228, %v230
      %v233 = vmul.f32 %v231, %v231
      %v234 = vmul.f32 %v232, %v232
      %v235 = vadd.f32 %v233, 1e-06
      %v236 = vadd.f32 %v234, 1e-06
      %v237 = vrsqrt.pop %v235
      %v238 = vmul.f32 %v235, %v237
      %vm239 = vcmp.eq.f32.partialorder %v235, inf
      %v240 = vsel %vm239, %v235, %v238
      %vm241 = vcmp.eq.f32.partialorder %v235, 0.0
      %v242 = vand.u32 %v235, 2147483648
      %v243 = vsel %vm241, %v242, %v240
      %v244 = vrsqrt.pop %v236
      %v245 = vmul.f32 %v236, %v244
      %vm246 = vcmp.eq.f32.partialorder %v236, inf
      %v247 = vsel %vm246, %v236, %v245
      %vm248 = vcmp.eq.f32.partialorder %v236, 0.0
      %v249 = vand.u32 %v236, 2147483648
      %v250 = vsel %vm248, %v249, %v247
      %s251 = sadd.s32 %s226, 2048
      %p252 = scmp.le.s32.totalorder %s251, 2048
      // Predicated region
      $region33: #{l1_charbonnier_loss.1} parent=27 // pred_check
        %p253 = pneg %p252
      $region34: #{l1_charbonnier_loss.1} parent=27 // pred_check_branch
        %255 = sbr.rel (%p253) target = $region36
      $region35: #{l1_charbonnier_loss.1} parent=27 // pred_region
        %v256 = vld [vmem:[#allocation2] sm:$0xff]
        %v257 = vadd.f32 %v243, %v250
        %v258 = vadd.f32 %v256, %v257
        %259 = vst [vmem:[#allocation2] sm:$0xff] %v258
      $region36: #{l1_charbonnier_loss.1} parent=27 // pred_fallthru
        _
      %p260 = scmp.gt.s32.totalorder %s251, 2048
      // Predicated region
      $region37: #{l1_charbonnier_loss.1} parent=27 // pred_check
        %p261 = pneg %p260
      $region38: #{l1_charbonnier_loss.1} parent=27 // pred_check_branch
        %263 = sbr.rel (%p261) target = $region40
      $region39: #{l1_charbonnier_loss.1} parent=27 // pred_region
        %v264 = vlaneseq
        %v265 = vshrl.u32 %v264, 7
        %v266 = vadd.s32 %v265, 8
        %v267 = vlaneseq
        %v268 = vand.u32 %v267, 127
        %v269 = vmul.u32 %v265, 128
        %v270 = vmul.u32 %v266, 128
        %v271 = vstv %s226
        %v272 = vadd.s32 %v271, %v269
        %v273 = vadd.s32 %v271, %v270
        %v274 = vadd.s32 %v272, %v268
        %v275 = vadd.s32 %v273, %v268
        %vm276 = vcmp.lt.s32.totalorder %v274, 2048
        %vm277 = vcmp.lt.s32.totalorder %v275, 2048
        %v278 = vsel %vm276, %v243, 0.0
        %v279 = vsel %vm277, %v250, 0.0
        %v280 = vld [vmem:[#allocation2] sm:$0xff]
        %v281 = vadd.f32 %v278, %v279
        %v282 = vadd.f32 %v280, %v281
        %283 = vst [vmem:[#allocation2] sm:$0xff] %v282
      $region40: #{l1_charbonnier_loss.1} parent=27 // pred_fallthru
        _
      // Predicated region
      $region41: #{l1_charbonnier_loss.1} parent=27 // pred_check
        %p284 = pneg %p220
      $region42: #{l1_charbonnier_loss.1} parent=27 // pred_check_branch
        %286 = sbr.rel (%p284) target = $region44
      $region43: #{l1_charbonnier_loss.1} parent=27 // pred_region
        %v287 = vld [vmem:[#allocation2] sm:$0xff]
        %288 = vst [vmem:[%s219] sm:$0xff] %v287
      $region44: #{l1_charbonnier_loss.1} parent=27 // pred_fallthru
        _
      %p289 = scmp.lt.s32.totalorder %s17, 1
      %s290 = scalar_select %p289, %s17, 1
      %s291 = smul.addr %s290, 8
      %s292 = scalar_lea.vmem %s2, %s291
      // Predicated region
      $region45: #{l1_charbonnier_loss.1} parent=27 // pred_check
        %p293 = pneg %p107
      $region46: #{l1_charbonnier_loss.1} parent=27 // pred_check_branch
        %295 = sbr.rel (%p293) target = $region48
      $region47: #{l1_charbonnier_loss.1} parent=27 // pred_region
        _
      $region48: #{l1_charbonnier_loss.1} parent=27 // pred_fallthru
        _
    $region28: #{l1_charbonnier_loss.1} parent=5 // pred_fallthru
      _
    %p296 = scmp.le.s32.totalorder 2, %s8
    // Predicated region
    $region49: #{l1_charbonnier_loss.1} parent=5 // pred_check
      %p297 = pneg %p296
    $region50: #{l1_charbonnier_loss.1} parent=5 // pred_check_branch
      %299 = sbr.rel (%p297) target = $region52
    $region51: #{l1_charbonnier_loss.1} parent=5 // pred_region
      %s300 = ssub.s32 %s8, 2
      // Predicated region
      $region53: #{l1_charbonnier_loss.1} parent=51 // pred_check
        %p301 = pneg %p113
      $region54: #{l1_charbonnier_loss.1} parent=51 // pred_check_branch
        %303 = sbr.rel (%p301) target = $region56
      $region55: #{l1_charbonnier_loss.1} parent=51 // pred_region
        %p304 = scmp.lt.s32.totalorder %s19, 1
        %s305 = scalar_select %p304, %s19, 1
        %s306 = smul.addr %s305, 8
        %s307 = scalar_lea.vmem %s2, %s306
      $region56: #{l1_charbonnier_loss.1} parent=51 // pred_fallthru
        _
    $region52: #{l1_charbonnier_loss.1} parent=5 // pred_fallthru
      _
  $region6: #{l1_charbonnier_loss.1} parent=0 // loop_footer
    %s12 = sadd.s32 1, %s8
  $region7: #{l1_charbonnier_loss.1} parent=0 // loop_footer_branch
    %7 = sbr.rel target = $region3
  $region8: #{l1_charbonnier_loss.1} parent=0 // loop_exit
    _

</llo_original>
